<compile_context>
chip_gen: v7x
topology: tpu7x:2x2x1
jax: 0.10.0
libtpu: 0.0.40
codegen_flags: <defaults>
</compile_context>

<pallas_src>
import math

import jax
import jax.numpy as jnp
from jax.experimental import pallas as pl
from jax.experimental.pallas import tpu as pltpu

_TARGET_BLOCK_BYTES = 8 * 1024 * 1024   # per x block (Pallas double-buffers it)


def _ar_kernel(x_ref, w_ref, b_ref, o_ref):
    """out[b, c] = sum_t w[t] * x[b, t, c] + bias   (f32 accumulation)."""
    T = x_ref.shape[1]
    # Unrolled multiply-accumulate over the time axis: each step is one full
    # (bt, ct) VPU pass with a scalar weight broadcast from SMEM. T is the AR
    # lookback window (small), so full unrolling is cheap and avoids any
    # cross-lane/XLU work.
    # TODO(synk): switch to a lax.fori_loop body if T ever gets large (>~256).
    acc = x_ref[:, 0, :].astype(jnp.float32) * w_ref[0]
    for t in range(1, T):
        acc = acc + x_ref[:, t, :].astype(jnp.float32) * w_ref[t]
    o_ref[...] = (acc + b_ref[0]).astype(o_ref.dtype)


@jax.jit
def ar_forward(x, w, b):
    """x: (B, T, C); w: (1, T) = nn.Linear(T, 1) weight; b: (1,) bias -> (B, 1, C)."""
    B, T, C = x.shape
    itemsize = jnp.dtype(x.dtype).itemsize

    # --- channel tile: lane-dense (multiple of 128) when C allows ---
    if C % 128 == 0:
        lanes = C // 128
        ct = 128
        for k in (8, 4, 2, 1):            # up to 1024-wide channel tiles
            if lanes % k == 0:
                ct = 128 * k
                break
    else:
        # Not padding C: input traffic dominates (output is 1/T of it), so
        # blowing up the x read to unmask stores would be a net loss.
        ct = C                            # full-extent block: no (8,128) constraint

    # --- batch tile: byte-budgeted so each x block is a few MiB ---
    bt_cap = max(1, _TARGET_BLOCK_BYTES // (T * ct * itemsize))
    if bt_cap >= B:
        bt = B                            # whole batch in one tile
    else:
        bt = max(8, (bt_cap // 8) * 8)    # output sublane dim: multiple of 8

    Bp = -(-B // bt) * bt                 # pad batch instead of asserting divisibility
    xp = x if Bp == B else jnp.pad(x, ((0, Bp - B), (0, 0), (0, 0)))

    grid = (Bp // bt, C // ct)

    # VMEM budget: double-buffered x tile + double-buffered out tile + slack;
    # floor at the 32 MiB scoped default, cap below v7x's 64 MiB physical VMEM.
    est = 2 * bt * T * ct * itemsize + 2 * bt * ct * itemsize + (1 << 20)
    vmem_limit = int(max(32 * 1024 * 1024, min(56 * 1024 * 1024, 2 * est)))

    w_s = w.reshape(-1).astype(jnp.float32)   # (T,)  -> SMEM (scalar reads)
    b_s = b.reshape(-1).astype(jnp.float32)   # (1,)  -> SMEM (scalar read)

    out2 = pl.pallas_call(
        _ar_kernel,
        out_shape=jax.ShapeDtypeStruct((Bp, C), x.dtype),
        grid=grid,
        in_specs=[
            pl.BlockSpec((bt, T, ct), lambda i, j: (i, 0, j)),       # x tile (VMEM)
            pl.BlockSpec(memory_space=pltpu.MemorySpace.SMEM),       # weight (whole, SMEM)
            pl.BlockSpec(memory_space=pltpu.MemorySpace.SMEM),       # bias   (whole, SMEM)
        ],
        out_specs=pl.BlockSpec((bt, ct), lambda i, j: (i, j)),
        compiler_params=pltpu.CompilerParams(
            dimension_semantics=("parallel", "parallel"),
            vmem_limit_bytes=vmem_limit,
        ),
    )(xp, w_s, b_s)

    return out2[:B].reshape(B, 1, C)


def _reference(x, w, b):
    """Pure-JAX reference matching the PyTorch forward."""
    xp = jnp.transpose(x, (0, 2, 1))                  # (B, C, T)
    y = jnp.einsum("bct,ot->bco", xp, w) + b          # (B, C, 1)
    return jnp.transpose(y, (0, 2, 1))                # (B, 1, C)


if __name__ == "__main__":
    B, T, C = 2, 8, 32   # batch, time window (Linear in_features), channels

    key = jax.random.PRNGKey(0)
    kx, kw, kb = jax.random.split(key, 3)

    x = jax.random.normal(kx, (B, T, C), dtype=jnp.float32)

    # Mimic nn.Linear(T, 1) init ranges / shapes.
    bound = 1.0 / math.sqrt(T)
    w = jax.random.uniform(kw, (1, T), minval=-bound, maxval=bound, dtype=jnp.float32)
    b = jax.random.uniform(kb, (1,), minval=-bound, maxval=bound, dtype=jnp.float32)

    out = ar_forward(x, w, b)
    out = jax.block_until_ready(out)

    ref = _reference(x, w, b)
    assert out.shape == (B, 1, C)
    assert jnp.allclose(out, ref, atol=1e-5, rtol=1e-5), "mismatch vs reference"

    print("KERNEL_OK")
</pallas_src>

<mosaic_0001>
module attributes {stable_mosaic.version = 11 : i64} {
  func.func @_ar_kernel(%arg0: i32, %arg1: i32, %arg2: memref<2x8x32xf32, #tpu.memory_space<vmem>>, %arg3: memref<8xf32, #tpu.memory_space<smem>>, %arg4: memref<1xf32, #tpu.memory_space<smem>>, %arg5: memref<2x32xf32, #tpu.memory_space<vmem>>) attributes {dimension_semantics = [#tpu.dimension_semantics<parallel>, #tpu.dimension_semantics<parallel>], iteration_bounds = array<i64: 1, 1>, scalar_prefetch = 0 : i64, scratch_operands = 0 : i64, tpu.core_type = #tpu.core_type<tc>, window_params = [{transform_indices = @transform_0, window_bounds = array<i64: 2, 8, 32>}, {transform_indices = @transform_1, window_bounds = array<i64: 8>}, {transform_indices = @transform_2, window_bounds = array<i64: 1>}, {transform_indices = @transform_3, window_bounds = array<i64: 2, 32>}]} {
    %c0 = arith.constant 0 : index
    %c0_0 = arith.constant 0 : index
    %c0_1 = arith.constant 0 : index
    %0 = vector.load %arg2[%c0, %c0_0, %c0_1] : memref<2x8x32xf32, #tpu.memory_space<vmem>>, vector<2x1x32xf32>
    %1 = vector.shape_cast %0 : vector<2x1x32xf32> to vector<2x32xf32>
    %c0_2 = arith.constant 0 : index
    %2 = memref.load %arg3[%c0_2] : memref<8xf32, #tpu.memory_space<smem>>
    %3 = vector.broadcast %2 : f32 to vector<2x32xf32>
    %4 = arith.mulf %1, %3 : vector<2x32xf32>
    %c0_3 = arith.constant 0 : index
    %c1 = arith.constant 1 : index
    %c0_4 = arith.constant 0 : index
    %5 = vector.load %arg2[%c0_3, %c1, %c0_4] : memref<2x8x32xf32, #tpu.memory_space<vmem>>, vector<2x1x32xf32>
    %6 = vector.shape_cast %5 : vector<2x1x32xf32> to vector<2x32xf32>
    %c1_5 = arith.constant 1 : index
    %7 = memref.load %arg3[%c1_5] : memref<8xf32, #tpu.memory_space<smem>>
    %8 = vector.broadcast %7 : f32 to vector<2x32xf32>
    %9 = arith.mulf %6, %8 : vector<2x32xf32>
    %10 = arith.addf %4, %9 : vector<2x32xf32>
    %c0_6 = arith.constant 0 : index
    %c2 = arith.constant 2 : index
    %c0_7 = arith.constant 0 : index
    %11 = vector.load %arg2[%c0_6, %c2, %c0_7] : memref<2x8x32xf32, #tpu.memory_space<vmem>>, vector<2x1x32xf32>
    %12 = vector.shape_cast %11 : vector<2x1x32xf32> to vector<2x32xf32>
    %c2_8 = arith.constant 2 : index
    %13 = memref.load %arg3[%c2_8] : memref<8xf32, #tpu.memory_space<smem>>
    %14 = vector.broadcast %13 : f32 to vector<2x32xf32>
    %15 = arith.mulf %12, %14 : vector<2x32xf32>
    %16 = arith.addf %10, %15 : vector<2x32xf32>
    %c0_9 = arith.constant 0 : index
    %c3 = arith.constant 3 : index
    %c0_10 = arith.constant 0 : index
    %17 = vector.load %arg2[%c0_9, %c3, %c0_10] : memref<2x8x32xf32, #tpu.memory_space<vmem>>, vector<2x1x32xf32>
    %18 = vector.shape_cast %17 : vector<2x1x32xf32> to vector<2x32xf32>
    %c3_11 = arith.constant 3 : index
    %19 = memref.load %arg3[%c3_11] : memref<8xf32, #tpu.memory_space<smem>>
    %20 = vector.broadcast %19 : f32 to vector<2x32xf32>
    %21 = arith.mulf %18, %20 : vector<2x32xf32>
    %22 = arith.addf %16, %21 : vector<2x32xf32>
    %c0_12 = arith.constant 0 : index
    %c4 = arith.constant 4 : index
    %c0_13 = arith.constant 0 : index
    %23 = vector.load %arg2[%c0_12, %c4, %c0_13] : memref<2x8x32xf32, #tpu.memory_space<vmem>>, vector<2x1x32xf32>
    %24 = vector.shape_cast %23 : vector<2x1x32xf32> to vector<2x32xf32>
    %c4_14 = arith.constant 4 : index
    %25 = memref.load %arg3[%c4_14] : memref<8xf32, #tpu.memory_space<smem>>
    %26 = vector.broadcast %25 : f32 to vector<2x32xf32>
    %27 = arith.mulf %24, %26 : vector<2x32xf32>
    %28 = arith.addf %22, %27 : vector<2x32xf32>
    %c0_15 = arith.constant 0 : index
    %c5 = arith.constant 5 : index
    %c0_16 = arith.constant 0 : index
    %29 = vector.load %arg2[%c0_15, %c5, %c0_16] : memref<2x8x32xf32, #tpu.memory_space<vmem>>, vector<2x1x32xf32>
    %30 = vector.shape_cast %29 : vector<2x1x32xf32> to vector<2x32xf32>
    %c5_17 = arith.constant 5 : index
    %31 = memref.load %arg3[%c5_17] : memref<8xf32, #tpu.memory_space<smem>>
    %32 = vector.broadcast %31 : f32 to vector<2x32xf32>
    %33 = arith.mulf %30, %32 : vector<2x32xf32>
    %34 = arith.addf %28, %33 : vector<2x32xf32>
    %c0_18 = arith.constant 0 : index
    %c6 = arith.constant 6 : index
    %c0_19 = arith.constant 0 : index
    %35 = vector.load %arg2[%c0_18, %c6, %c0_19] : memref<2x8x32xf32, #tpu.memory_space<vmem>>, vector<2x1x32xf32>
    %36 = vector.shape_cast %35 : vector<2x1x32xf32> to vector<2x32xf32>
    %c6_20 = arith.constant 6 : index
    %37 = memref.load %arg3[%c6_20] : memref<8xf32, #tpu.memory_space<smem>>
    %38 = vector.broadcast %37 : f32 to vector<2x32xf32>
    %39 = arith.mulf %36, %38 : vector<2x32xf32>
    %40 = arith.addf %34, %39 : vector<2x32xf32>
    %c0_21 = arith.constant 0 : index
    %c7 = arith.constant 7 : index
    %c0_22 = arith.constant 0 : index
    %41 = vector.load %arg2[%c0_21, %c7, %c0_22] : memref<2x8x32xf32, #tpu.memory_space<vmem>>, vector<2x1x32xf32>
    %42 = vector.shape_cast %41 : vector<2x1x32xf32> to vector<2x32xf32>
    %c7_23 = arith.constant 7 : index
    %43 = memref.load %arg3[%c7_23] : memref<8xf32, #tpu.memory_space<smem>>
    %44 = vector.broadcast %43 : f32 to vector<2x32xf32>
    %45 = arith.mulf %42, %44 : vector<2x32xf32>
    %46 = arith.addf %40, %45 : vector<2x32xf32>
    %c0_24 = arith.constant 0 : index
    %47 = memref.load %arg4[%c0_24] : memref<1xf32, #tpu.memory_space<smem>>
    %48 = vector.broadcast %47 : f32 to vector<2x32xf32>
    %49 = arith.addf %46, %48 : vector<2x32xf32>
    %c0_25 = arith.constant 0 : index
    %c0_26 = arith.constant 0 : index
    %50 = vector.load %arg5[%c0_25, %c0_26] : memref<2x32xf32, #tpu.memory_space<vmem>>, vector<2x32xf32>
    tpu.vector_store %arg5[%c0_25, %c0_26], %49 {strides = array<i32>} : memref<2x32xf32, #tpu.memory_space<vmem>>, vector<2x32xf32>,
    return
  }
  func.func @transform_0(%arg0: i32, %arg1: i32) -> (i32, i32, i32) {
    %c0_i32 = arith.constant 0 : i32
    %c0_i32_0 = arith.constant 0 : i32
    return %arg0, %c0_i32, %arg1 : i32, i32, i32
  }
  func.func @transform_1(%arg0: i32, %arg1: i32) -> i32 {
    %c0_i32 = arith.constant 0 : i32
    %c0_i32_0 = arith.constant 0 : i32
    return %c0_i32 : i32
  }
  func.func @transform_2(%arg0: i32, %arg1: i32) -> i32 {
    %c0_i32 = arith.constant 0 : i32
    %c0_i32_0 = arith.constant 0 : i32
    return %c0_i32 : i32
  }
  func.func @transform_3(%arg0: i32, %arg1: i32) -> (i32, i32) {
    %c0_i32 = arith.constant 0 : i32
    return %arg0, %arg1 : i32, i32
  }
}

</mosaic_0001>

<llo_original>
// kernel: ar_forward.1
$region0: #{ar_forward.1}
  #allocation0 [shape = 'u32[]', space=smem, size = 0x4, offset = 0x4, fixed_abs, tag = 'smem constant byte address 0x4 - core index']
  #allocation1 [shape = 'u32[144,128]{1,0:T(1,128)}', space=vmem, size = 0x12000, scoped, tag = 'internal scratch']
  #allocation2 [shape = 'f32[1]{0:T(128)S(6)}', space=smem, size = 0x200, scoped, tag = 'scoped memory for ar_forward.1']
  %s0 = inlined_call_operand.hbm [shape: f32[2,8,32], index: 0, kind: input, shape index: {}]
  %s1 = inlined_call_operand.vmem [shape: f32[8], index: 1, kind: input, shape index: {}]
  %s2 = inlined_call_operand.<no memory space> [shape: f32[1], index: 2, kind: input, shape index: {}]
  %s3 = inlined_call_operand.hbm [shape: f32[2,32], index: 3, kind: output, shape index: {}]
  %s4 = sld [smem:[#allocation0]]
  $region30: #{ar_forward.1} parent=0
    _
  %s6 = ssub.s32 1, %s4
  %s7 = scalar_select 0, %s6, %s4
  %8 = sst [smem:[#allocation2]] %s2
  $region1: #{ar_forward.1} parent=0
    #allocation3 [shape = 'u8[8192]{0}', space=vmem, size = 0x2000, scoped, tag = 'input window, operand 0, single buffered']
    #allocation4 [shape = 's32[1]{0}', space=sflag, size = 0x4, scoped, tag = 'scoped memory for ar_forward.1']
    #allocation5 [shape = 's32[1]{0}', space=sflag, size = 0x4, scoped, tag = 'scoped memory for ar_forward.1']
    #allocation6 [shape = 's32[1]{0}', space=sflag, size = 0x4, scoped, tag = 'scoped memory for ar_forward.1']
    #allocation7 [shape = 'u8[512]{0}', space=smem, size = 0x200, scoped, tag = 'input window, operand 1, single buffered']
    #allocation8 [shape = 'u8[1024]{0}', space=vmem, size = 0x400, scoped, tag = 'output window, operand 0, single buffered']
    %9 = vsyncpa [#allocation4], 0
    %10 = vsyncpa [#allocation6], 0
    %11 = vsyncpa [#allocation5], 0
    // Predicated region
    $region2: #{ar_forward.1} parent=1 // pred_check
      _
    $region3: #{ar_forward.1} parent=1 // pred_check_branch
      %13 = sbr.rel (0) target = $region5
    $region4: #{ar_forward.1} parent=1 // pred_region
      %s15 = ssub.s32 256, 256
      %16 = vsyncadd [#allocation4], %s15
      %s17 = sshll.u32 [#allocation3], 4
      %s18 = int_to_ptr.vmem [resolvable:$true] %s17
      %23 = dma.hbm_to_vmem [thread:$0]  %s0, 256, %s18, [#allocation4], 128, 128, 8
    $region5: #{ar_forward.1} parent=1 // pred_fallthru
      _
    // Predicated region
    $region6: #{ar_forward.1} parent=1 // pred_check
      _
    $region7: #{ar_forward.1} parent=1 // pred_check_branch
      %25 = sbr.rel (0) target = $region9
    $region8: #{ar_forward.1} parent=1 // pred_region
      %s27 = ssub.s32 16, 16
      %28 = vsyncadd [#allocation6], %s27
      %s30 = sshll.u32 %s1, 4
      %s31 = int_to_ptr.vmem [resolvable:$true] %s30
      %33 = dma.vmem_to_smem %s31, 16, [#allocation7], [#allocation6]
    $region9: #{ar_forward.1} parent=1 // pred_fallthru
      _
    // Predicated region
    $region10: #{ar_forward.1} parent=1 // pred_check
      _
    $region11: #{ar_forward.1} parent=1 // pred_check_branch
      %35 = sbr.rel (0) target = $region13
    $region12: #{ar_forward.1} parent=1 // pred_region
      _
    $region13: #{ar_forward.1} parent=1 // pred_fallthru
      _
    // Predicated region
    $region14: #{ar_forward.1} parent=1 // pred_check
      _
    $region15: #{ar_forward.1} parent=1 // pred_check_branch
      %37 = sbr.rel (0) target = $region17
    $region16: #{ar_forward.1} parent=1 // pred_region
      %38 = dma.done [#allocation4], 256
    $region17: #{ar_forward.1} parent=1 // pred_fallthru
      _
    // Predicated region
    $region18: #{ar_forward.1} parent=1 // pred_check
      _
    $region19: #{ar_forward.1} parent=1 // pred_check_branch
      %40 = sbr.rel (0) target = $region21
    $region20: #{ar_forward.1} parent=1 // pred_region
      %41 = dma.done [#allocation6], 16
    $region21: #{ar_forward.1} parent=1 // pred_fallthru
      _
    %42 = sfence
    %v43 = vld [vmem:[#allocation3] sm:$0x1]
    %v44 = vld [vmem:[#allocation3 + $0x8] sm:$0x1]
    %s45 = sld [smem:[#allocation7]]
    %v46 = vstv %s45
    %v47 = vmul.f32 %v43, %v46
    %v48 = vmul.f32 %v44, %v46
    %v49 = vld [vmem:[#allocation3 + $0x1] sm:$0x1]
    %v50 = vld [vmem:[#allocation3 + $0x9] sm:$0x1]
    %s51 = sld [smem:[#allocation7 + $0x1]]
    %v52 = vstv %s51
    %v53 = vmul.f32 %v49, %v52
    %v54 = vmul.f32 %v50, %v52
    %v55 = vadd.f32 %v47, %v53
    %v56 = vadd.f32 %v48, %v54
    %v57 = vld [vmem:[#allocation3 + $0x2] sm:$0x1]
    %v58 = vld [vmem:[#allocation3 + $0xa] sm:$0x1]
    %s59 = sld [smem:[#allocation7 + $0x2]]
    %v60 = vstv %s59
    %v61 = vmul.f32 %v57, %v60
    %v62 = vmul.f32 %v58, %v60
    %v63 = vadd.f32 %v55, %v61
    %v64 = vadd.f32 %v56, %v62
    %v65 = vld [vmem:[#allocation3 + $0x3] sm:$0x1]
    %v66 = vld [vmem:[#allocation3 + $0xb] sm:$0x1]
    %s67 = sld [smem:[#allocation7 + $0x3]]
    %v68 = vstv %s67
    %v69 = vmul.f32 %v65, %v68
    %v70 = vmul.f32 %v66, %v68
    %v71 = vadd.f32 %v63, %v69
    %v72 = vadd.f32 %v64, %v70
    %v73 = vld [vmem:[#allocation3 + $0x4] sm:$0x1]
    %v74 = vld [vmem:[#allocation3 + $0xc] sm:$0x1]
    %s75 = sld [smem:[#allocation7 + $0x4]]
    %v76 = vstv %s75
    %v77 = vmul.f32 %v73, %v76
    %v78 = vmul.f32 %v74, %v76
    %v79 = vadd.f32 %v71, %v77
    %v80 = vadd.f32 %v72, %v78
    %v81 = vld [vmem:[#allocation3 + $0x5] sm:$0x1]
    %v82 = vld [vmem:[#allocation3 + $0xd] sm:$0x1]
    %s83 = sld [smem:[#allocation7 + $0x5]]
    %v84 = vstv %s83
    %v85 = vmul.f32 %v81, %v84
    %v86 = vmul.f32 %v82, %v84
    %v87 = vadd.f32 %v79, %v85
    %v88 = vadd.f32 %v80, %v86
    %v89 = vld [vmem:[#allocation3 + $0x6] sm:$0x1]
    %v90 = vld [vmem:[#allocation3 + $0xe] sm:$0x1]
    %s91 = sld [smem:[#allocation7 + $0x6]]
    %v92 = vstv %s91
    %v93 = vmul.f32 %v89, %v92
    %v94 = vmul.f32 %v90, %v92
    %v95 = vadd.f32 %v87, %v93
    %v96 = vadd.f32 %v88, %v94
    %v97 = vld [vmem:[#allocation3 + $0x7] sm:$0x1]
    %v98 = vld [vmem:[#allocation3 + $0xf] sm:$0x1]
    %s99 = sld [smem:[#allocation7 + $0x7]]
    %v100 = vstv %s99
    %v101 = vmul.f32 %v97, %v100
    %v102 = vmul.f32 %v98, %v100
    %v103 = vadd.f32 %v95, %v101
    %v104 = vadd.f32 %v96, %v102
    %s105 = sld [smem:[#allocation2]]
    %v106 = vstv %s105
    %v107 = vadd.f32 %v103, %v106
    %v108 = vadd.f32 %v104, %v106
    %v111 = vrot.slane %v108, 7
    %vm112 = vcmask 1041409
    %v113 = vsel %vm112, %v111, %v107
    %vm115 = vcmask 254976
    %116 = vst.msk [vmem:[#allocation8] sm:$0x3] %vm115, %v113
    // Predicated region
    $region22: #{ar_forward.1} parent=1 // pred_check
      _
    $region23: #{ar_forward.1} parent=1 // pred_check_branch
      %118 = sbr.rel (0) target = $region25
    $region24: #{ar_forward.1} parent=1 // pred_region
      %s120 = ssub.s32 32, 32
      %121 = vsyncadd [#allocation5], %s120
      %s123 = sshll.u32 [#allocation8], 4
      %s124 = int_to_ptr.vmem [resolvable:$true] %s123
      %126 = dma.vmem_to_hbm [thread:$0]  %s124, 32, %s3, [#allocation5]
    $region25: #{ar_forward.1} parent=1 // pred_fallthru
      _
    // Predicated region
    $region26: #{ar_forward.1} parent=1 // pred_check
      _
    $region27: #{ar_forward.1} parent=1 // pred_check_branch
      %128 = sbr.rel (0) target = $region29
    $region28: #{ar_forward.1} parent=1 // pred_region
      %129 = dma.done [#allocation5], 32
    $region29: #{ar_forward.1} parent=1 // pred_fallthru
      _
    %130 = vsyncpa [#allocation4], 1
    %131 = vsyncpa [#allocation5], 1
    %132 = vsyncpa [#allocation6], 1

</llo_original>
